<compile_context>
chip_gen: v7x
topology: tpu7x:2x2x1
jax: 0.10.0
libtpu: 0.0.40
codegen_flags: <defaults>
</compile_context>

<pallas_src>
import functools

import jax
import jax.numpy as jnp
from jax.experimental import pallas as pl
from jax.experimental.pallas import tpu as pltpu

BN_EPS = 1e-5


def txnn_ffe_kernel(x_ref, w_ref, o_ref, *, inv_m):
    """Conv1d(1,C,K)+bias (one MXU matmul) -> tanh -> BatchNorm1d(1, affine=False).

    x_ref: (N, L+1)           VMEM  input rows with a trailing homogeneous 1
    w_ref: (L+1, C_out*Lout)  VMEM  banded Toeplitz conv weights + bias row
    o_ref: (N, C_out*Lout)    VMEM  lane-dense normalized output
    """
    # --- Conv1d + bias as a single MXU matmul --------------------------------
    y = jnp.dot(x_ref[...], w_ref[...], preferred_element_type=jnp.float32)
    act = jnp.tanh(y)                                        # (N, C_out*Lout)

    # --- BatchNorm1d(1, affine=False), training mode, fused single pass ------
    # Flattened activations form an (M, 1) batch with a single feature, so the
    # statistics run over every element.  Single-pass variance is safe because
    # tanh output is bounded in (-1, 1).
    s = jnp.sum(act)
    sq = jnp.sum(act * act)
    mean = s * inv_m
    var = sq * inv_m - mean * mean
    inv = jax.lax.rsqrt(var + BN_EPS)

    o_ref[...] = ((act - mean) * inv).astype(o_ref.dtype)


def txnn_ffe_forward(x, w, b):
    """x: (N, 1, L); w: (C_out, 1, K) like PyTorch Conv1d weight; b: (C_out,)."""
    n, c_in, l = x.shape
    assert c_in == 1, "TxNN_FFE uses in_dim == 1"
    c_out, _, k = w.shape
    lout = l - k + 1

    x2d = x[:, 0, :].astype(jnp.float32)   # (N, L)
    w2d = w[:, 0, :].astype(jnp.float32)   # (C_out, K)
    b1d = b.astype(jnp.float32)            # (C_out,)

    # Banded Toeplitz weight: w_band[l_in, c*Lout + j] = w[c, l_in - j] when the
    # tap index lies in [0, K), else 0.  Columns are channel-major blocks so the
    # matmul output, flattened row-major, matches PyTorch's (N, C, Lout) order.
    li = jnp.arange(l)[:, None]                 # (L, 1)
    jj = jnp.arange(lout)[None, :]              # (1, Lout)
    tap = li - jj                               # (L, Lout)
    valid = (tap >= 0) & (tap < k)
    tap_c = jnp.clip(tap, 0, k - 1)
    band = jnp.where(valid[None, :, :], w2d[:, tap_c], 0.0)   # (C_out, L, Lout)
    w_band = jnp.transpose(band, (1, 0, 2)).reshape(l, c_out * lout)

    # Fold the conv bias into the matmul: append the bias row to the band matrix
    # and a homogeneous "1" column to x (removes a separate bias input + add).
    bias_row = jnp.repeat(b1d, lout)[None, :]                 # (1, C_out*Lout)
    w_aug = jnp.concatenate([w_band, bias_row], axis=0)       # (L+1, C_out*Lout)
    x_aug = jnp.pad(x2d, ((0, 0), (0, 1)), constant_values=1.0)  # (N, L+1)

    kernel = functools.partial(txnn_ffe_kernel, inv_m=1.0 / float(n * c_out * lout))
    y = pl.pallas_call(
        kernel,
        out_shape=jax.ShapeDtypeStruct((n, c_out * lout), jnp.float32),
        in_specs=[
            pl.BlockSpec(memory_space=pltpu.MemorySpace.VMEM),   # x (augmented)
            pl.BlockSpec(memory_space=pltpu.MemorySpace.VMEM),   # band + bias row
        ],
        out_specs=pl.BlockSpec(memory_space=pltpu.MemorySpace.VMEM),
    )(x_aug, w_aug)

    # Row-major flatten of (N, C_out*Lout) == PyTorch reshape(-1, 2).reshape(-1, 1)
    # of the contiguous (N, C, Lout) conv output: free reshape, no transpose.
    return y.reshape(-1, 1)


def _reference_forward(x, w, b):
    """Pure-JAX reference of the PyTorch forward (training-mode BatchNorm)."""
    y = jax.lax.conv_general_dilated(
        x, w, window_strides=(1,), padding="VALID",
        dimension_numbers=("NCH", "OIH", "NCH"))
    y = y + b[None, :, None]
    t = jnp.tanh(y).reshape(-1)
    mean = jnp.mean(t)
    var = jnp.mean((t - mean) ** 2)
    return ((t - mean) * jax.lax.rsqrt(var + BN_EPS)).reshape(-1, 1)


if __name__ == "__main__":
    # R['TxNN_seq_len_FFE'] is an external config; pick seqLen = 8 here.
    SEQ_LEN = 8
    N, L = 8, 64
    C_OUT = 2

    key = jax.random.PRNGKey(0)
    kx, kw, kb = jax.random.split(key, 3)
    x = jax.random.normal(kx, (N, 1, L), dtype=jnp.float32)

    # Deterministic synthetic Conv1d(1, 2, SEQ_LEN, bias=True) parameters.
    bound = 1.0 / (1 * SEQ_LEN) ** 0.5
    w = jax.random.uniform(kw, (C_OUT, 1, SEQ_LEN), minval=-bound, maxval=bound,
                           dtype=jnp.float32)
    b = jax.random.uniform(kb, (C_OUT,), minval=-bound, maxval=bound,
                           dtype=jnp.float32)

    out = jax.block_until_ready(jax.jit(txnn_ffe_forward)(x, w, b))

    lout = L - SEQ_LEN + 1
    assert out.shape == (N * C_OUT * lout, 1)

    ref = _reference_forward(x, w, b)
    assert jnp.allclose(out, ref, atol=1e-3, rtol=1e-3), "mismatch vs reference"

    # TODO(synk): BatchNorm running-stat updates (momentum bookkeeping) are
    # training state, not part of the forward output, so they are not emitted.
    print("KERNEL_OK")
</pallas_src>

<mosaic_0001>
module attributes {stable_mosaic.version = 11 : i64} {
  func.func @txnn_ffe_kernel(%arg0: memref<8x65xf32, #tpu.memory_space<vmem>>, %arg1: memref<65x114xf32, #tpu.memory_space<vmem>>, %arg2: memref<8x114xf32, #tpu.memory_space<vmem>>) attributes {dimension_semantics = [], scalar_prefetch = 0 : i64, scratch_operands = 0 : i64, tpu.core_type = #tpu.core_type<tc>} {
    %c0 = arith.constant 0 : index
    %c0_0 = arith.constant 0 : index
    %0 = vector.load %arg0[%c0, %c0_0] : memref<8x65xf32, #tpu.memory_space<vmem>>, vector<8x65xf32>
    %c0_1 = arith.constant 0 : index
    %c0_2 = arith.constant 0 : index
    %1 = vector.load %arg1[%c0_1, %c0_2] : memref<65x114xf32, #tpu.memory_space<vmem>>, vector<65x114xf32>
    %cst = arith.constant dense<0.000000e+00> : vector<8x114xf32>
    %2 = tpu.matmul %0, %1, %cst {dimension_numbers = #tpu.dot_dimension_numbers<[1], [0], [0], [1], [0, 0, 1, 1], [], []>} : vector<8x65xf32>, vector<65x114xf32>, vector<8x114xf32> -> vector<8x114xf32>
    %3 = math.tanh %2 : vector<8x114xf32>
    %4 = vector.shape_cast %3 : vector<8x114xf32> to vector<1x8x114xf32>
    %cst_3 = arith.constant dense<0.000000e+00> : vector<1xf32>
    %5 = vector.multi_reduction <add>, %4, %cst_3 [1, 2] : vector<1x8x114xf32> to vector<1xf32>
    %6 = vector.shape_cast %5 : vector<1xf32> to vector<1x1x1xf32>
    %7 = vector.extract %6[0, 0, 0] : f32 from vector<1x1x1xf32>
    %8 = arith.mulf %3, %3 : vector<8x114xf32>
    %9 = vector.shape_cast %8 : vector<8x114xf32> to vector<1x8x114xf32>
    %cst_4 = arith.constant dense<0.000000e+00> : vector<1xf32>
    %10 = vector.multi_reduction <add>, %9, %cst_4 [1, 2] : vector<1x8x114xf32> to vector<1xf32>
    %11 = vector.shape_cast %10 : vector<1xf32> to vector<1x1x1xf32>
    %12 = vector.extract %11[0, 0, 0] : f32 from vector<1x1x1xf32>
    %cst_5 = arith.constant 0.00109649124 : f32
    %13 = arith.mulf %7, %cst_5 : f32
    %cst_6 = arith.constant 0.00109649124 : f32
    %14 = arith.mulf %12, %cst_6 : f32
    %15 = arith.mulf %13, %13 : f32
    %16 = arith.subf %14, %15 : f32
    %cst_7 = arith.constant 9.99999974E-6 : f32
    %17 = arith.addf %16, %cst_7 : f32
    %18 = math.rsqrt %17 : f32
    %19 = vector.broadcast %13 : f32 to vector<8x114xf32>
    %20 = arith.subf %3, %19 : vector<8x114xf32>
    %21 = vector.broadcast %18 : f32 to vector<8x114xf32>
    %22 = arith.mulf %20, %21 : vector<8x114xf32>
    %c0_8 = arith.constant 0 : index
    %c0_9 = arith.constant 0 : index
    %23 = vector.load %arg2[%c0_8, %c0_9] : memref<8x114xf32, #tpu.memory_space<vmem>>, vector<8x114xf32>
    tpu.vector_store %arg2[%c0_8, %c0_9], %22 {strides = array<i32>} : memref<8x114xf32, #tpu.memory_space<vmem>>, vector<8x114xf32>,
    return
  }
}

</mosaic_0001>

<llo_original>
// kernel: txnn_ffe_forward.1
$region0: #{txnn_ffe_forward.1}
  #allocation0 [shape = 'u32[]', space=smem, size = 0x4, offset = 0x4, fixed_abs, tag = 'smem constant byte address 0x4 - core index']
  #allocation1 [shape = 'u32[144,128]{1,0:T(1,128)}', space=vmem, size = 0x12000, scoped, tag = 'internal scratch']
  %s0 = inlined_call_operand.vmem [shape: f32[8,65], index: 0, kind: input, shape index: {}]
  %s1 = inlined_call_operand.vmem [shape: f32[65,114], index: 1, kind: input, shape index: {}]
  %s2 = inlined_call_operand.vmem [shape: f32[8,114], index: 2, kind: output, shape index: {}]
  %s3 = sld [smem:[#allocation0]]
  $region18: #{txnn_ffe_forward.1} parent=0
    _
  %s5 = ssub.s32 1, %s3
  %s6 = scalar_select 0, %s5, %s3
  // Predicated region
  $region2: #{txnn_ffe_forward.1} parent=0 // pred_check
    _
  $region3: #{txnn_ffe_forward.1} parent=0 // pred_check_branch
    %8 = sbr.rel (0) target = $region5
  $region4: #{txnn_ffe_forward.1} parent=0 // pred_region
    _
  $region5: #{txnn_ffe_forward.1} parent=0 // pred_fallthru
    _
  // Predicated region
  $region6: #{txnn_ffe_forward.1} parent=0 // pred_check
    _
  $region7: #{txnn_ffe_forward.1} parent=0 // pred_check_branch
    %10 = sbr.rel (0) target = $region9
  $region8: #{txnn_ffe_forward.1} parent=0 // pred_region
    _
  $region9: #{txnn_ffe_forward.1} parent=0 // pred_fallthru
    _
  %v11 = vld [vmem:[%s0] sm:$0xff]
  %v12 = vld [vmem:[%s1] sm:$0xff]
  %v13 = vld [vmem:[%s1 + $0x8] sm:$0xff]
  %v14 = vld [vmem:[%s1 + $0x10] sm:$0xff]
  %v15 = vld [vmem:[%s1 + $0x18] sm:$0xff]
  %v16 = vld [vmem:[%s1 + $0x20] sm:$0xff]
  %v17 = vld [vmem:[%s1 + $0x28] sm:$0xff]
  %v18 = vld [vmem:[%s1 + $0x30] sm:$0xff]
  %v19 = vld [vmem:[%s1 + $0x38] sm:$0xff]
  %v20 = vld [vmem:[%s1 + $0x40] sm:$0x1]
  %vm21 = vcmask 531456
  %v23 = vsel %vm21, %v11, 0
  %vm25 = vcmask 1040384
  %v27 = vsel %vm25, %v20, 0
  %29 = vmatprep.subr.mxu0 0.0
  %30 = vmatpush1.msra.mxu0 %v12
  %31 = vmatprep.subr.mxu0 0.0
  %32 = vmatpush1.msra.mxu0 %v13
  %33 = vmatprep.subr.mxu0 0.0
  %34 = vmatpush1.msra.mxu0 %v14
  %35 = vmatprep.subr.mxu0 0.0
  %36 = vmatpush1.msra.mxu0 %v15
  %37 = vmatprep.subr.mxu0 0.0
  %38 = vmatpush1.msra.mxu0 %v16
  %39 = vmatprep.subr.mxu0 0.0
  %40 = vmatpush1.msra.mxu0 %v17
  %41 = vmatprep.subr.mxu0 0.0
  %42 = vmatpush1.msra.mxu0 %v18
  %43 = vmatprep.subr.mxu0 0.0
  %44 = vmatpush1.msra.mxu0 %v19
  %45 = vmatprep.subr.mxu0 0.0
  %46 = vmatpush1.msra.mxu0 %v27
  %47 = vmatprep.subr.mxu0 0.0
  %48 = vmatpush1.msra.mxu0 0.0
  %49 = vmatprep.subr.mxu0 0.0
  %50 = vmatpush1.msra.mxu0 0.0
  %51 = vmatprep.subr.mxu0 0.0
  %52 = vmatpush1.msra.mxu0 0.0
  %53 = vmatprep.subr.mxu0 0.0
  %54 = vmatpush1.msra.mxu0 0.0
  %55 = vmatprep.subr.mxu0 0.0
  %56 = vmatpush1.msra.mxu0 0.0
  %57 = vmatprep.subr.mxu0 0.0
  %58 = vmatpush1.msra.mxu0 0.0
  %59 = vmatprep.subr.mxu0 0.0
  %60 = vmatpush1.msra.mxu0 0.0
  %61 = vmatprep.subr.mxu0 0.0
  %62 = vmatpush1.msra.mxu0 0.0
  %63 = vmatprep.subr.mxu0 0.0
  %64 = vmatpush1.msra.mxu0 0.0
  %65 = vmatprep.subr.mxu0 0.0
  %66 = vmatpush1.msra.mxu0 0.0
  %67 = vmatprep.subr.mxu0 0.0
  %68 = vmatpush1.msra.mxu0 0.0
  %69 = vmatprep.subr.mxu0 0.0
  %70 = vmatpush1.msra.mxu0 0.0
  %71 = vmatprep.subr.mxu0 0.0
  %72 = vmatpush1.msra.mxu0 0.0
  %73 = vmatprep.subr.mxu0 0.0
  %74 = vmatpush1.msra.mxu0 0.0
  %75 = vmatprep.subr.mxu0 0.0
  %76 = vmatpush1.msra.mxu0 0.0
  %77 = vmatprep.subr.mxu0 0.0
  %78 = vmatpush1.msra.mxu0 0.0
  %79 = vmatprep.subr.mxu0 0.0
  %80 = vmatpush1.msra.mxu0 0.0
  %81 = vmatprep.subr.mxu0 0.0
  %82 = vmatpush1.msra.mxu0 0.0
  %83 = vmatprep.subr.mxu0 0.0
  %84 = vmatpush1.msra.mxu0 0.0
  %85 = vmatprep.subr.mxu0 0.0
  %86 = vmatpush1.msra.mxu0 0.0
  %87 = vmatprep.subr.mxu0 0.0
  %88 = vmatpush1.msra.mxu0 0.0
  %89 = vmatprep.subr.mxu0 0.0
  %90 = vmatpush1.msra.mxu0 0.0
  %91 = vmatprep.subr.mxu0 0.0
  %92 = vmatpush1.msra.mxu0 0.0
  %93 = vmatprep.mubr.f32.mxu0 0.0
  %94 = vmatmul.mubr.f32.gmra.mrb[0].mxu0 %v23
  %v95 = vpop.f32.mrb[0].mxu0
  %v96 = vadd.f32 0.0, %v95
  %v97 = vpop.f32.mrb[0].mxu0
  %98 = vdwg.mxu0
  %v99 = vtanh.pop %v96
  %vm100 = vcmask 932864
  %v101 = vsel %vm100, %v99, 0.0
  %102 = vadd.xlane.f32.xlu0 %v101
  %v103 = vpop.xlane.xlu0 %102
  %v104 = vrot.slane %v103, 4
  %v105 = vadd.f32 %v103, %v104
  %v106 = vrot.slane %v105, 2
  %v107 = vadd.f32 %v105, %v106
  %v108 = vrot.slane %v107, 1
  %v109 = vadd.f32 %v107, %v108
  %s110 = vtos %v109
  %v111 = vmul.f32 %v99, %v99
  %v112 = vsel %vm100, %v111, 0.0
  %113 = vadd.xlane.f32.xlu0 %v112
  %v114 = vpop.xlane.xlu0 %113
  %v115 = vrot.slane %v114, 4
  %v116 = vadd.f32 %v114, %v115
  %v117 = vrot.slane %v116, 2
  %v118 = vadd.f32 %v116, %v117
  %v119 = vrot.slane %v118, 1
  %v120 = vadd.f32 %v118, %v119
  %s121 = vtos %v120
  %s122 = smul.f32 %s110, 0.0010964912
  %s123 = smul.f32 %s121, 0.0010964912
  %s124 = smul.f32 %s122, %s122
  %s125 = ssub.f32 %s123, %s124
  %s126 = sadd.f32 %s125, 1e-05
  %v127 = vstv %s126
  %v128 = vrsqrt.pop %v127
  %s129 = vtos %v128
  %v130 = vstv %s122
  %v131 = vsub.f32 %v99, %v130
  %v132 = vstv %s129
  %v133 = vmul.f32 %v131, %v132
  %134 = vst.msk [vmem:[%s2] sm:$0xff] %vm100, %v133
  // Predicated region
  $region10: #{txnn_ffe_forward.1} parent=0 // pred_check
    _
  $region11: #{txnn_ffe_forward.1} parent=0 // pred_check_branch
    %136 = sbr.rel (0) target = $region13
  $region12: #{txnn_ffe_forward.1} parent=0 // pred_region
    _
  $region13: #{txnn_ffe_forward.1} parent=0 // pred_fallthru
    _
  // Predicated region
  $region14: #{txnn_ffe_forward.1} parent=0 // pred_check
    _
  $region15: #{txnn_ffe_forward.1} parent=0 // pred_check_branch
    %138 = sbr.rel (0) target = $region17
  $region16: #{txnn_ffe_forward.1} parent=0 // pred_region
    _
  $region17: #{txnn_ffe_forward.1} parent=0 // pred_fallthru
    _

</llo_original>
